<compile_context>
chip_gen: v5e
topology: v5e:2x2
jax: 0.10.0
libtpu: 0.0.40
codegen_flags: <defaults>
</compile_context>

<pallas_src>
from collections import OrderedDict

import jax
import jax.numpy as jnp
from jax.experimental import pallas as pl
from jax.experimental.pallas import tpu as pltpu


# ----------------------------------------------------------------------------
# Fused kernel: encoder matmul -> reparameterization -> decoder matmul
# ----------------------------------------------------------------------------
def fused_vae_kernel(x_ref, eps_ref, wenc_ref, benc_ref, wdec_ref, bdec_ref,
                     out_ref):
    L = eps_ref.shape[-1]

    x = x_ref[...]                                                # (B, flat) bf16
    # Single MXU pass producing [mu | logvar] together, f32 accumulate.
    enc = jnp.dot(x, wenc_ref[...],
                  preferred_element_type=jnp.float32) + benc_ref[...]  # (B, 2L)
    mu = enc[:, :L]
    logvar = enc[:, L:]

    std = jnp.exp(0.5 * logvar)                                   # EUP
    z = mu + std * eps_ref[...]                                   # (B, L) f32

    rec = jnp.dot(z.astype(wdec_ref.dtype), wdec_ref[...],
                  preferred_element_type=jnp.float32) + bdec_ref[...]  # (B, flat)
    out_ref[...] = rec


# ----------------------------------------------------------------------------
# Wrapper: one pallas_call over all VAEs
# ----------------------------------------------------------------------------
def neck_vae_forward(inputs, stacked_params, eps_stack):
    """NeckVAE.forward.

    inputs        : OrderedDict or list of (B, C, H, W) f32 arrays (all same shape)
    stacked_params: dict of per-VAE-stacked weights (see pack_params)
    eps_stack     : (num_vae, B, latent_dim) f32 reparameterization noise
    """
    if isinstance(inputs, OrderedDict):
        inputs = list(inputs.values())

    N = len(inputs)
    B, C, H, W = inputs[0].shape
    flat = C * H * W
    L = eps_stack.shape[-1]

    # Flatten exactly like torch.flatten(1) (row-major NCHW) and stack per VAE.
    x_stack = jnp.stack([x.reshape(B, flat) for x in inputs], axis=0)  # (N, B, flat)
    x_stack = x_stack.astype(jnp.bfloat16)

    recon_flat = pl.pallas_call(
        fused_vae_kernel,
        grid=(N,),
        in_specs=[
            pl.BlockSpec((None, B, flat),   lambda i: (i, 0, 0)),   # x
            pl.BlockSpec((None, B, L),      lambda i: (i, 0, 0)),   # eps
            pl.BlockSpec((None, flat, 2 * L), lambda i: (i, 0, 0)), # [w_mu|w_lv]
            pl.BlockSpec((None, 1, 2 * L),  lambda i: (i, 0, 0)),   # [b_mu|b_lv]
            pl.BlockSpec((None, L, flat),   lambda i: (i, 0, 0)),   # w_dec
            pl.BlockSpec((None, 1, flat),   lambda i: (i, 0, 0)),   # b_dec
        ],
        out_specs=pl.BlockSpec((None, B, flat), lambda i: (i, 0, 0)),
        out_shape=jax.ShapeDtypeStruct((N, B, flat), jnp.float32),
        compiler_params=pltpu.CompilerParams(
            dimension_semantics=("parallel",)),   # v7x: one VAE per TensorCore
    )(x_stack, eps_stack,
      stacked_params["w_enc"], stacked_params["b_enc"],
      stacked_params["w_dec"], stacked_params["b_dec"])

    recon = recon_flat.reshape(N, B, C, H, W)
    return OrderedDict([(f"x_dict_l{i}", recon[i]) for i in range(N)])


# ----------------------------------------------------------------------------
# Parameter init (PyTorch nn.Linear default U[-1/sqrt(fan_in), +]) and packing
# ----------------------------------------------------------------------------
def init_base_vae_params(key, in_channels, in_shape, latent_dim):
    H, W = in_shape
    flat = in_channels * H * W
    k_mu_w, k_mu_b, k_lv_w, k_lv_b, k_de_w, k_de_b = jax.random.split(key, 6)

    def lin(kw, kb, fan_in, fan_out):
        bound = 1.0 / jnp.sqrt(fan_in)
        # stored as (in, out) == torch weight (out, in) transposed
        w = jax.random.uniform(kw, (fan_in, fan_out), jnp.float32, -bound, bound)
        b = jax.random.uniform(kb, (1, fan_out), jnp.float32, -bound, bound)
        return w, b

    w_mu, b_mu = lin(k_mu_w, k_mu_b, flat, latent_dim)
    w_lv, b_lv = lin(k_lv_w, k_lv_b, flat, latent_dim)
    w_dec, b_dec = lin(k_de_w, k_de_b, latent_dim, flat)
    return dict(w_mu=w_mu, b_mu=b_mu, w_lv=w_lv, b_lv=b_lv,
                w_dec=w_dec, b_dec=b_dec)


def pack_params(per_vae_params):
    """Stack per-VAE params for the fused grid kernel; weights as bf16."""
    w_enc = jnp.stack([jnp.concatenate([p["w_mu"], p["w_lv"]], axis=1)
                       for p in per_vae_params], axis=0)            # (N, flat, 2L)
    b_enc = jnp.stack([jnp.concatenate([p["b_mu"], p["b_lv"]], axis=1)
                       for p in per_vae_params], axis=0)            # (N, 1, 2L) f32
    w_dec = jnp.stack([p["w_dec"] for p in per_vae_params], axis=0)  # (N, L, flat)
    b_dec = jnp.stack([p["b_dec"] for p in per_vae_params], axis=0)  # (N, 1, flat)
    return dict(
        w_enc=w_enc.astype(jnp.bfloat16),
        b_enc=b_enc.astype(jnp.float32),
        w_dec=w_dec.astype(jnp.bfloat16),
        b_dec=b_dec.astype(jnp.float32),
    )


# ----------------------------------------------------------------------------
# Main
# ----------------------------------------------------------------------------
if __name__ == "__main__":
    num_vae = 2
    in_channels = 4
    in_shape = (16, 16)
    latent_dim = 32
    B = 2

    root = jax.random.PRNGKey(0)
    k_params, k_inputs, k_eps = jax.random.split(root, 3)

    per_vae_params = [
        init_base_vae_params(k, in_channels, in_shape, latent_dim)
        for k in jax.random.split(k_params, num_vae)
    ]
    stacked_params = pack_params(per_vae_params)

    inputs = OrderedDict()
    for i, k in enumerate(jax.random.split(k_inputs, num_vae)):
        inputs[f"in_l{i}"] = jax.random.normal(
            k, (B, in_channels, in_shape[0], in_shape[1]), jnp.float32)

    # Deterministic reparameterization noise (torch.randn_like equivalent).
    eps_stack = jax.random.normal(k_eps, (num_vae, B, latent_dim), jnp.float32)

    out = neck_vae_forward(inputs, stacked_params, eps_stack)
    for v in out.values():
        jax.block_until_ready(v)

    # sanity checks
    assert list(out.keys()) == [f"x_dict_l{i}" for i in range(num_vae)]
    for v in out.values():
        assert v.shape == (B, in_channels, in_shape[0], in_shape[1])
        assert v.dtype == jnp.float32
        assert bool(jnp.all(jnp.isfinite(v)))

    print("KERNEL_OK")
</pallas_src>

<mosaic_0001>
module attributes {stable_mosaic.version = 11 : i64} {
  func.func @fused_vae_kernel(%arg0: i32, %arg1: memref<1x2x1024xbf16, #tpu.memory_space<vmem>>, %arg2: memref<1x2x32xf32, #tpu.memory_space<vmem>>, %arg3: memref<1x1024x64xbf16, #tpu.memory_space<vmem>>, %arg4: memref<1x1x64xf32, #tpu.memory_space<vmem>>, %arg5: memref<1x32x1024xbf16, #tpu.memory_space<vmem>>, %arg6: memref<1x1x1024xf32, #tpu.memory_space<vmem>>, %arg7: memref<1x2x1024xf32, #tpu.memory_space<vmem>>) attributes {dimension_semantics = [#tpu.dimension_semantics<parallel>], iteration_bounds = array<i64: 2>, scalar_prefetch = 0 : i64, scratch_operands = 0 : i64, tpu.core_type = #tpu.core_type<tc>, window_params = [{transform_indices = @transform_0, window_bounds = array<i64: 1, 2, 1024>}, {transform_indices = @transform_1, window_bounds = array<i64: 1, 2, 32>}, {transform_indices = @transform_2, window_bounds = array<i64: 1, 1024, 64>}, {transform_indices = @transform_3, window_bounds = array<i64: 1, 1, 64>}, {transform_indices = @transform_4, window_bounds = array<i64: 1, 32, 1024>}, {transform_indices = @transform_5, window_bounds = array<i64: 1, 1, 1024>}, {transform_indices = @transform_6, window_bounds = array<i64: 1, 2, 1024>}]} {
    %c0 = arith.constant 0 : index
    %c0_0 = arith.constant 0 : index
    %c0_1 = arith.constant 0 : index
    %0 = vector.load %arg1[%c0, %c0_0, %c0_1] : memref<1x2x1024xbf16, #tpu.memory_space<vmem>>, vector<1x2x1024xbf16>
    %1 = vector.shape_cast %0 : vector<1x2x1024xbf16> to vector<2x1024xbf16>
    %c0_2 = arith.constant 0 : index
    %c0_3 = arith.constant 0 : index
    %c0_4 = arith.constant 0 : index
    %2 = vector.load %arg3[%c0_2, %c0_3, %c0_4] : memref<1x1024x64xbf16, #tpu.memory_space<vmem>>, vector<1x1024x64xbf16>
    %3 = vector.shape_cast %2 : vector<1x1024x64xbf16> to vector<1024x64xbf16>
    %cst = arith.constant dense<0.000000e+00> : vector<2x64xf32>
    %4 = tpu.matmul %1, %3, %cst {dimension_numbers = #tpu.dot_dimension_numbers<[1], [0], [0], [1], [0, 0, 1, 1], [], []>} : vector<2x1024xbf16>, vector<1024x64xbf16>, vector<2x64xf32> -> vector<2x64xf32>
    %c0_5 = arith.constant 0 : index
    %c0_6 = arith.constant 0 : index
    %c0_7 = arith.constant 0 : index
    %5 = vector.load %arg4[%c0_5, %c0_6, %c0_7] : memref<1x1x64xf32, #tpu.memory_space<vmem>>, vector<1x1x64xf32>
    %6 = vector.shape_cast %5 : vector<1x1x64xf32> to vector<1x64xf32>
    %7 = vector.broadcast %6 : vector<1x64xf32> to vector<2x64xf32>
    %8 = arith.addf %4, %7 : vector<2x64xf32>
    %9 = vector.extract_strided_slice %8 {offsets = [0, 0], sizes = [2, 32], strides = [1, 1]} : vector<2x64xf32> to vector<2x32xf32>
    %10 = vector.extract_strided_slice %8 {offsets = [0, 32], sizes = [2, 32], strides = [1, 1]} : vector<2x64xf32> to vector<2x32xf32>
    %cst_8 = arith.constant 5.000000e-01 : f32
    %11 = vector.broadcast %cst_8 : f32 to vector<2x32xf32>
    %12 = arith.mulf %11, %10 : vector<2x32xf32>
    %13 = math.exp %12 : vector<2x32xf32>
    %c0_9 = arith.constant 0 : index
    %c0_10 = arith.constant 0 : index
    %c0_11 = arith.constant 0 : index
    %14 = vector.load %arg2[%c0_9, %c0_10, %c0_11] : memref<1x2x32xf32, #tpu.memory_space<vmem>>, vector<1x2x32xf32>
    %15 = vector.shape_cast %14 : vector<1x2x32xf32> to vector<2x32xf32>
    %16 = arith.mulf %13, %15 : vector<2x32xf32>
    %17 = arith.addf %9, %16 : vector<2x32xf32>
    %18 = arith.truncf %17 : vector<2x32xf32> to vector<2x32xbf16>
    %c0_12 = arith.constant 0 : index
    %c0_13 = arith.constant 0 : index
    %c0_14 = arith.constant 0 : index
    %19 = vector.load %arg5[%c0_12, %c0_13, %c0_14] : memref<1x32x1024xbf16, #tpu.memory_space<vmem>>, vector<1x32x1024xbf16>
    %20 = vector.shape_cast %19 : vector<1x32x1024xbf16> to vector<32x1024xbf16>
    %cst_15 = arith.constant dense<0.000000e+00> : vector<2x1024xf32>
    %21 = tpu.matmul %18, %20, %cst_15 {dimension_numbers = #tpu.dot_dimension_numbers<[1], [0], [0], [1], [0, 0, 1, 1], [], []>} : vector<2x32xbf16>, vector<32x1024xbf16>, vector<2x1024xf32> -> vector<2x1024xf32>
    %c0_16 = arith.constant 0 : index
    %c0_17 = arith.constant 0 : index
    %c0_18 = arith.constant 0 : index
    %22 = vector.load %arg6[%c0_16, %c0_17, %c0_18] : memref<1x1x1024xf32, #tpu.memory_space<vmem>>, vector<1x1x1024xf32>
    %23 = vector.shape_cast %22 : vector<1x1x1024xf32> to vector<1x1024xf32>
    %24 = vector.broadcast %23 : vector<1x1024xf32> to vector<2x1024xf32>
    %25 = arith.addf %21, %24 : vector<2x1024xf32>
    %c0_19 = arith.constant 0 : index
    %c0_20 = arith.constant 0 : index
    %c0_21 = arith.constant 0 : index
    %26 = vector.load %arg7[%c0_19, %c0_20, %c0_21] : memref<1x2x1024xf32, #tpu.memory_space<vmem>>, vector<1x2x1024xf32>
    %27 = vector.shape_cast %26 : vector<1x2x1024xf32> to vector<2x1024xf32>
    %28 = vector.shape_cast %25 : vector<2x1024xf32> to vector<1x2x1024xf32>
    tpu.vector_store %arg7[%c0_19, %c0_20, %c0_21], %28 {strides = array<i32>} : memref<1x2x1024xf32, #tpu.memory_space<vmem>>, vector<1x2x1024xf32>,
    return
  }
  func.func @transform_0(%arg0: i32) -> (i32, i32, i32) {
    %c0_i32 = arith.constant 0 : i32
    %c0_i32_0 = arith.constant 0 : i32
    %c0_i32_1 = arith.constant 0 : i32
    return %arg0, %c0_i32, %c0_i32_0 : i32, i32, i32
  }
  func.func @transform_1(%arg0: i32) -> (i32, i32, i32) {
    %c0_i32 = arith.constant 0 : i32
    %c0_i32_0 = arith.constant 0 : i32
    %c0_i32_1 = arith.constant 0 : i32
    return %arg0, %c0_i32, %c0_i32_0 : i32, i32, i32
  }
  func.func @transform_2(%arg0: i32) -> (i32, i32, i32) {
    %c0_i32 = arith.constant 0 : i32
    %c0_i32_0 = arith.constant 0 : i32
    %c0_i32_1 = arith.constant 0 : i32
    return %arg0, %c0_i32, %c0_i32_0 : i32, i32, i32
  }
  func.func @transform_3(%arg0: i32) -> (i32, i32, i32) {
    %c0_i32 = arith.constant 0 : i32
    %c0_i32_0 = arith.constant 0 : i32
    %c0_i32_1 = arith.constant 0 : i32
    return %arg0, %c0_i32, %c0_i32_0 : i32, i32, i32
  }
  func.func @transform_4(%arg0: i32) -> (i32, i32, i32) {
    %c0_i32 = arith.constant 0 : i32
    %c0_i32_0 = arith.constant 0 : i32
    %c0_i32_1 = arith.constant 0 : i32
    return %arg0, %c0_i32, %c0_i32_0 : i32, i32, i32
  }
  func.func @transform_5(%arg0: i32) -> (i32, i32, i32) {
    %c0_i32 = arith.constant 0 : i32
    %c0_i32_0 = arith.constant 0 : i32
    %c0_i32_1 = arith.constant 0 : i32
    return %arg0, %c0_i32, %c0_i32_0 : i32, i32, i32
  }
  func.func @transform_6(%arg0: i32) -> (i32, i32, i32) {
    %c0_i32 = arith.constant 0 : i32
    %c0_i32_0 = arith.constant 0 : i32
    %c0_i32_1 = arith.constant 0 : i32
    return %arg0, %c0_i32, %c0_i32_0 : i32, i32, i32
  }
}

</mosaic_0001>

<llo_original>
// kernel: tpu_custom_call.1
$region0: #{tpu_custom_call.1}
  #allocation0 [shape = 'u32[]', space=smem, size = 0x4, offset = 0x4, fixed_abs, tag = 'smem constant byte address 0x4 - core index']
  #allocation1 [shape = 'u32[72,128]{1,0:T(1,128)}', space=vmem, size = 0x9000, scoped, tag = 'internal scratch']
  %s0 = inlined_call_operand.vmem [shape: bf16[2,2,1024], index: 0, kind: input, shape index: {}]
  %s1 = inlined_call_operand.vmem [shape: f32[2,2,32], index: 1, kind: input, shape index: {}]
  %s2 = inlined_call_operand.vmem [shape: bf16[2,1024,64], index: 2, kind: input, shape index: {}]
  %s3 = inlined_call_operand.vmem [shape: f32[2,1,64], index: 3, kind: input, shape index: {}]
  %s4 = inlined_call_operand.vmem [shape: bf16[2,32,1024], index: 4, kind: input, shape index: {}]
  %s5 = inlined_call_operand.vmem [shape: f32[2,1,1024], index: 5, kind: input, shape index: {}]
  %s6 = inlined_call_operand.hbm [shape: f32[2,2,1024], index: 6, kind: output, shape index: {}]
  %s7 = sld [smem:[#allocation0]]
  $region57: #{tpu_custom_call.1} parent=0
    _
  %s9 = ssub.s32 1, %s7
  %s10 = scalar_select 0, %s9, %s7
  $region1: #{tpu_custom_call.1} parent=0
    #allocation2 [shape = 'u8[16384]{0}', space=vmem, size = 0x4000, scoped, tag = 'output window, operand 0']
    #allocation3 [shape = 's32[2]{0}', space=sflag, size = 0x8, scoped, tag = 'scoped memory for tpu_custom_call.1']
    %11 = vsyncpa [#allocation3], 0
    %s12 = scalar_lea.sflag [#allocation3], 1
    %13 = vsyncpa %s12, 0
    loop: start=0, step=1, limit=4
    $region2: #{tpu_custom_call.1} parent=1 // loop_pre_header
      _
    $region3: #{tpu_custom_call.1} parent=1 // loop_header
      %s15 = sphi 0, %s19
      %p16 = scmp.ge.s32.totalorder %s15, 4
      %s25 = sphi 0, %s27
      %s28 = sphi 0, %s25
      %s29 = sphi 0, %s28
      %s45 = sphi 0, %s29
      %s51 = sphi 0, %s53
      %s54 = sphi 0, %s51
      %s55 = sphi 0, %s54
      %s71 = sphi 0, %s55
      %s77 = sphi 0, %s79
      %s80 = sphi 0, %s77
      %s81 = sphi 0, %s80
      %s97 = sphi 0, %s81
      %s103 = sphi 0, %s105
      %s106 = sphi 0, %s103
      %s107 = sphi 0, %s106
      %s123 = sphi 0, %s107
      %s129 = sphi 0, %s131
      %s132 = sphi 0, %s129
      %s133 = sphi 0, %s132
      %s149 = sphi 0, %s133
      %s155 = sphi 0, %s157
      %s158 = sphi 0, %s155
      %s159 = sphi 0, %s158
      %s175 = sphi 0, %s159
      %s181 = sphi 0, %s183
      %s184 = sphi 0, %s181
      %s185 = sphi 0, %s184
      %s201 = sphi 0, %s185
    $region4: #{tpu_custom_call.1} parent=1 // loop_header_branch
      %18 = sbr.rel (%p16) target = $region8
    $region5: #{tpu_custom_call.1} parent=1 // loop_body
      %s20 = ssub.s32 %s15, 1
      %s21 = ssub.s32 %s15, 2
      %s22 = sadd.s32 %s15, 1
      %s23 = ssub.s32 %s15, %s22
      %p24 = scmp.eq.s32.totalorder %s23, 0
      %s26 = sadd.s32 %s25, 1
      %s27 = scalar_select %p24, %s25, %s26
      %p30 = pneg %p24
      %p31 = scmp.eq.s32.totalorder %s15, 1
      %p32 = por %p30, %p31
      %p33 = scmp.ne.s32.totalorder %s25, %s28
      %p34 = scmp.eq.s32.totalorder %s15, 0
      %p35 = por %p33, %p34
      %p36 = scmp.ne.s32.totalorder %s25, %s28
      %p37 = scmp.eq.s32.totalorder %s20, 1
      %p38 = por %p36, %p37
      %p39 = scmp.ne.s32.totalorder %s28, %s29
      %p40 = scmp.eq.s32.totalorder %s20, 0
      %p41 = por %p39, %p40
      %p42 = scmp.ne.s32.totalorder %s28, %s29
      %p43 = scmp.eq.s32.totalorder %s21, 1
      %p44 = por %p42, %p43
      %p46 = scmp.ne.s32.totalorder %s29, %s45
      %p47 = scmp.eq.s32.totalorder %s21, 0
      %p48 = por %p46, %p47
      %s49 = ssub.s32 %s15, %s22
      %p50 = scmp.eq.s32.totalorder %s49, 0
      %s52 = sadd.s32 %s51, 1
      %s53 = scalar_select %p50, %s51, %s52
      %p56 = pneg %p50
      %p57 = scmp.eq.s32.totalorder %s15, 1
      %p58 = por %p56, %p57
      %p59 = scmp.ne.s32.totalorder %s51, %s54
      %p60 = scmp.eq.s32.totalorder %s15, 0
      %p61 = por %p59, %p60
      %p62 = scmp.ne.s32.totalorder %s51, %s54
      %p63 = scmp.eq.s32.totalorder %s20, 1
      %p64 = por %p62, %p63
      %p65 = scmp.ne.s32.totalorder %s54, %s55
      %p66 = scmp.eq.s32.totalorder %s20, 0
      %p67 = por %p65, %p66
      %p68 = scmp.ne.s32.totalorder %s54, %s55
      %p69 = scmp.eq.s32.totalorder %s21, 1
      %p70 = por %p68, %p69
      %p72 = scmp.ne.s32.totalorder %s55, %s71
      %p73 = scmp.eq.s32.totalorder %s21, 0
      %p74 = por %p72, %p73
      %s75 = ssub.s32 %s15, %s22
      %p76 = scmp.eq.s32.totalorder %s75, 0
      %s78 = sadd.s32 %s77, 1
      %s79 = scalar_select %p76, %s77, %s78
      %p82 = pneg %p76
      %p83 = scmp.eq.s32.totalorder %s15, 1
      %p84 = por %p82, %p83
      %p85 = scmp.ne.s32.totalorder %s77, %s80
      %p86 = scmp.eq.s32.totalorder %s15, 0
      %p87 = por %p85, %p86
      %p88 = scmp.ne.s32.totalorder %s77, %s80
      %p89 = scmp.eq.s32.totalorder %s20, 1
      %p90 = por %p88, %p89
      %p91 = scmp.ne.s32.totalorder %s80, %s81
      %p92 = scmp.eq.s32.totalorder %s20, 0
      %p93 = por %p91, %p92
      %p94 = scmp.ne.s32.totalorder %s80, %s81
      %p95 = scmp.eq.s32.totalorder %s21, 1
      %p96 = por %p94, %p95
      %p98 = scmp.ne.s32.totalorder %s81, %s97
      %p99 = scmp.eq.s32.totalorder %s21, 0
      %p100 = por %p98, %p99
      %s101 = ssub.s32 %s15, %s22
      %p102 = scmp.eq.s32.totalorder %s101, 0
      %s104 = sadd.s32 %s103, 1
      %s105 = scalar_select %p102, %s103, %s104
      %p108 = pneg %p102
      %p109 = scmp.eq.s32.totalorder %s15, 1
      %p110 = por %p108, %p109
      %p111 = scmp.ne.s32.totalorder %s103, %s106
      %p112 = scmp.eq.s32.totalorder %s15, 0
      %p113 = por %p111, %p112
      %p114 = scmp.ne.s32.totalorder %s103, %s106
      %p115 = scmp.eq.s32.totalorder %s20, 1
      %p116 = por %p114, %p115
      %p117 = scmp.ne.s32.totalorder %s106, %s107
      %p118 = scmp.eq.s32.totalorder %s20, 0
      %p119 = por %p117, %p118
      %p120 = scmp.ne.s32.totalorder %s106, %s107
      %p121 = scmp.eq.s32.totalorder %s21, 1
      %p122 = por %p120, %p121
      %p124 = scmp.ne.s32.totalorder %s107, %s123
      %p125 = scmp.eq.s32.totalorder %s21, 0
      %p126 = por %p124, %p125
      %s127 = ssub.s32 %s15, %s22
      %p128 = scmp.eq.s32.totalorder %s127, 0
      %s130 = sadd.s32 %s129, 1
      %s131 = scalar_select %p128, %s129, %s130
      %p134 = pneg %p128
      %p135 = scmp.eq.s32.totalorder %s15, 1
      %p136 = por %p134, %p135
      %p137 = scmp.ne.s32.totalorder %s129, %s132
      %p138 = scmp.eq.s32.totalorder %s15, 0
      %p139 = por %p137, %p138
      %p140 = scmp.ne.s32.totalorder %s129, %s132
      %p141 = scmp.eq.s32.totalorder %s20, 1
      %p142 = por %p140, %p141
      %p143 = scmp.ne.s32.totalorder %s132, %s133
      %p144 = scmp.eq.s32.totalorder %s20, 0
      %p145 = por %p143, %p144
      %p146 = scmp.ne.s32.totalorder %s132, %s133
      %p147 = scmp.eq.s32.totalorder %s21, 1
      %p148 = por %p146, %p147
      %p150 = scmp.ne.s32.totalorder %s133, %s149
      %p151 = scmp.eq.s32.totalorder %s21, 0
      %p152 = por %p150, %p151
      %s153 = ssub.s32 %s15, %s22
      %p154 = scmp.eq.s32.totalorder %s153, 0
      %s156 = sadd.s32 %s155, 1
      %s157 = scalar_select %p154, %s155, %s156
      %p160 = pneg %p154
      %p161 = scmp.eq.s32.totalorder %s15, 1
      %p162 = por %p160, %p161
      %p163 = scmp.ne.s32.totalorder %s155, %s158
      %p164 = scmp.eq.s32.totalorder %s15, 0
      %p165 = por %p163, %p164
      %p166 = scmp.ne.s32.totalorder %s155, %s158
      %p167 = scmp.eq.s32.totalorder %s20, 1
      %p168 = por %p166, %p167
      %p169 = scmp.ne.s32.totalorder %s158, %s159
      %p170 = scmp.eq.s32.totalorder %s20, 0
      %p171 = por %p169, %p170
      %p172 = scmp.ne.s32.totalorder %s158, %s159
      %p173 = scmp.eq.s32.totalorder %s21, 1
      %p174 = por %p172, %p173
      %p176 = scmp.ne.s32.totalorder %s159, %s175
      %p177 = scmp.eq.s32.totalorder %s21, 0
      %p178 = por %p176, %p177
      %s179 = ssub.s32 %s15, %s22
      %p180 = scmp.eq.s32.totalorder %s179, 0
      %s182 = sadd.s32 %s181, 1
      %s183 = scalar_select %p180, %s181, %s182
      %p186 = pneg %p180
      %p187 = scmp.eq.s32.totalorder %s15, 1
      %p188 = por %p186, %p187
      %p189 = scmp.ne.s32.totalorder %s181, %s184
      %p190 = scmp.eq.s32.totalorder %s15, 0
      %p191 = por %p189, %p190
      %p192 = scmp.ne.s32.totalorder %s181, %s184
      %p193 = scmp.eq.s32.totalorder %s20, 1
      %p194 = por %p192, %p193
      %p195 = scmp.ne.s32.totalorder %s184, %s185
      %p196 = scmp.eq.s32.totalorder %s20, 0
      %p197 = por %p195, %p196
      %p198 = scmp.ne.s32.totalorder %s184, %s185
      %p199 = scmp.eq.s32.totalorder %s21, 1
      %p200 = por %p198, %p199
      %p202 = scmp.ne.s32.totalorder %s185, %s201
      %p203 = scmp.eq.s32.totalorder %s21, 0
      %p204 = por %p202, %p203
      %p205 = scmp.le.s32.totalorder 1, %s15
      %p206 = scmp.lt.s32.totalorder %s15, 3
      %p207 = pnand %p205, %p206
      %p208 = pneg %p207
      // Predicated region
      $region9: #{tpu_custom_call.1} parent=5 // pred_check
        _
      $region10: #{tpu_custom_call.1} parent=5 // pred_check_branch
        %210 = sbr.rel (%p207) target = $region12
      $region11: #{tpu_custom_call.1} parent=5 // pred_region
        %s211 = ssub.s32 %s15, 1
      $region12: #{tpu_custom_call.1} parent=5 // pred_fallthru
        _
      %p212 = scmp.lt.s32.totalorder %s15, 2
      // Predicated region
      $region13: #{tpu_custom_call.1} parent=5 // pred_check
        %p213 = pneg %p212
      $region14: #{tpu_custom_call.1} parent=5 // pred_check_branch
        %215 = sbr.rel (%p213) target = $region16
      $region15: #{tpu_custom_call.1} parent=5 // pred_region
        // Predicated region
        $region17: #{tpu_custom_call.1} parent=15 // pred_check
          %p216 = pneg %p35
        $region18: #{tpu_custom_call.1} parent=15 // pred_check_branch
          %218 = sbr.rel (%p216) target = $region20
        $region19: #{tpu_custom_call.1} parent=15 // pred_region
          %p219 = scmp.lt.s32.totalorder %s15, 1
          %s220 = scalar_select %p219, %s15, 1
          %s221 = smul.addr %s220, 8
          %s222 = scalar_lea.vmem %s0, %s221
        $region20: #{tpu_custom_call.1} parent=15 // pred_fallthru
          _
        // Predicated region
        $region21: #{tpu_custom_call.1} parent=15 // pred_check
          %p223 = pneg %p61
        $region22: #{tpu_custom_call.1} parent=15 // pred_check_branch
          %225 = sbr.rel (%p223) target = $region24
        $region23: #{tpu_custom_call.1} parent=15 // pred_region
          %p226 = scmp.lt.s32.totalorder %s15, 1
          %s227 = scalar_select %p226, %s15, 1
          %s228 = smul.addr %s227, 2
          %s229 = scalar_lea.vmem %s1, %s228
        $region24: #{tpu_custom_call.1} parent=15 // pred_fallthru
          _
        // Predicated region
        $region25: #{tpu_custom_call.1} parent=15 // pred_check
          %p230 = pneg %p87
        $region26: #{tpu_custom_call.1} parent=15 // pred_check_branch
          %232 = sbr.rel (%p230) target = $region28
        $region27: #{tpu_custom_call.1} parent=15 // pred_region
          %p233 = scmp.lt.s32.totalorder %s15, 1
          %s234 = scalar_select %p233, %s15, 1
          %s235 = smul.addr %s234, 128
          %s236 = smul.addr %s235, 4
          %s237 = scalar_lea.vmem %s2, %s236
        $region28: #{tpu_custom_call.1} parent=15 // pred_fallthru
          _
        // Predicated region
        $region29: #{tpu_custom_call.1} parent=15 // pred_check
          %p238 = pneg %p113
        $region30: #{tpu_custom_call.1} parent=15 // pred_check_branch
          %240 = sbr.rel (%p238) target = $region32
        $region31: #{tpu_custom_call.1} parent=15 // pred_region
          %p241 = scmp.lt.s32.totalorder %s15, 1
          %s242 = scalar_select %p241, %s15, 1
          %s243 = scalar_lea.vmem %s3, %s242
        $region32: #{tpu_custom_call.1} parent=15 // pred_fallthru
          _
        // Predicated region
        $region33: #{tpu_custom_call.1} parent=15 // pred_check
          %p244 = pneg %p139
        $region34: #{tpu_custom_call.1} parent=15 // pred_check_branch
          %246 = sbr.rel (%p244) target = $region36
        $region35: #{tpu_custom_call.1} parent=15 // pred_region
          %p247 = scmp.lt.s32.totalorder %s15, 1
          %s248 = scalar_select %p247, %s15, 1
          %s249 = smul.addr %s248, 32
          %s250 = smul.addr %s249, 4
          %s251 = scalar_lea.vmem %s4, %s250
        $region36: #{tpu_custom_call.1} parent=15 // pred_fallthru
          _
        // Predicated region
        $region37: #{tpu_custom_call.1} parent=15 // pred_check
          %p252 = pneg %p165
        $region38: #{tpu_custom_call.1} parent=15 // pred_check_branch
          %254 = sbr.rel (%p252) target = $region40
        $region39: #{tpu_custom_call.1} parent=15 // pred_region
          %p255 = scmp.lt.s32.totalorder %s15, 1
          %s256 = scalar_select %p255, %s15, 1
          %s257 = smul.addr %s256, 8
          %s258 = scalar_lea.vmem %s5, %s257
        $region40: #{tpu_custom_call.1} parent=15 // pred_fallthru
          _
      $region16: #{tpu_custom_call.1} parent=5 // pred_fallthru
        _
      %p259 = scmp.le.s32.totalorder 1, %s15
      %p260 = scmp.lt.s32.totalorder %s15, 3
      %p261 = pnand %p259, %p260
      %p262 = pneg %p261
      // Predicated region
      $region41: #{tpu_custom_call.1} parent=5 // pred_check
        _
      $region42: #{tpu_custom_call.1} parent=5 // pred_check_branch
        %264 = sbr.rel (%p261) target = $region44
      $region43: #{tpu_custom_call.1} parent=5 // pred_region
        %s265 = ssub.s32 %s15, 1
        %p266 = scmp.lt.s32.totalorder %s20, 1
        %s267 = scalar_select %p266, %s20, 1
        %s268 = smul.addr %s267, 8
        %s269 = scalar_lea.vmem %s0, %s268
        %p270 = pneg %p41
        %p271 = pneg %p38
        %p272 = scmp.lt.s32.totalorder %s20, 1
        %s273 = scalar_select %p272, %s20, 1
        %s274 = smul.addr %s273, 2
        %s275 = scalar_lea.vmem %s1, %s274
        %p276 = pneg %p67
        %p277 = pneg %p64
        %p278 = scmp.lt.s32.totalorder %s20, 1
        %s279 = scalar_select %p278, %s20, 1
        %s280 = smul.addr %s279, 128
        %s281 = smul.addr %s280, 4
        %s282 = scalar_lea.vmem %s2, %s281
        %p283 = pneg %p93
        %p284 = pneg %p90
        %p285 = scmp.lt.s32.totalorder %s20, 1
        %s286 = scalar_select %p285, %s20, 1
        %s287 = scalar_lea.vmem %s3, %s286
        %p288 = pneg %p119
        %p289 = pneg %p116
        %p290 = scmp.lt.s32.totalorder %s20, 1
        %s291 = scalar_select %p290, %s20, 1
        %s292 = smul.addr %s291, 32
        %s293 = smul.addr %s292, 4
        %s294 = scalar_lea.vmem %s4, %s293
        %p295 = pneg %p145
        %p296 = pneg %p142
        %p297 = scmp.lt.s32.totalorder %s20, 1
        %s298 = scalar_select %p297, %s20, 1
        %s299 = smul.addr %s298, 8
        %s300 = scalar_lea.vmem %s5, %s299
        %p301 = pneg %p171
        %p302 = pneg %p168
        %p303 = pneg %p197
        %p304 = pneg %p194
        %s305 = sand.u32 %s184, 1
        %s306 = scalar_lea.sflag [#allocation3], %s305
        %s307 = sand.u32 %s184, 1
        %s308 = smul.addr %s307, 16
        %s309 = scalar_lea.vmem [#allocation2], %s308
        %p310 = scmp.lt.s32.totalorder %s20, 1
        %s311 = scalar_select %p310, %s20, 1
        %s312 = smul.addr %s311, 8
        %s313 = scalar_lea.vmem %s0, %s312
        %p314 = scmp.lt.s32.totalorder %s20, 1
        %s315 = scalar_select %p314, %s20, 1
        %s316 = smul.addr %s315, 2
        %s317 = scalar_lea.vmem %s1, %s316
        %p318 = scmp.lt.s32.totalorder %s20, 1
        %s319 = scalar_select %p318, %s20, 1
        %s320 = smul.addr %s319, 128
        %s321 = smul.addr %s320, 4
        %s322 = scalar_lea.vmem %s2, %s321
        %p323 = scmp.lt.s32.totalorder %s20, 1
        %s324 = scalar_select %p323, %s20, 1
        %s325 = scalar_lea.vmem %s3, %s324
        %p326 = scmp.lt.s32.totalorder %s20, 1
        %s327 = scalar_select %p326, %s20, 1
        %s328 = smul.addr %s327, 32
        %s329 = smul.addr %s328, 4
        %s330 = scalar_lea.vmem %s4, %s329
        %p331 = scmp.lt.s32.totalorder %s20, 1
        %s332 = scalar_select %p331, %s20, 1
        %s333 = smul.addr %s332, 8
        %s334 = scalar_lea.vmem %s5, %s333
        %v336 = vld [vmem:[%s313] sm:$0xff]
        %v337 = vld [vmem:[%s322] sm:$0xf]
        %v338 = vld [vmem:[%s322 + $0x4] sm:$0xf]
        %v339 = vld [vmem:[%s322 + $0x8] sm:$0xf]
        %v340 = vld [vmem:[%s322 + $0xc] sm:$0xf]
        %v341 = vld [vmem:[%s322 + $0x10] sm:$0xf]
        %v342 = vld [vmem:[%s322 + $0x14] sm:$0xf]
        %v343 = vld [vmem:[%s322 + $0x18] sm:$0xf]
        %v344 = vld [vmem:[%s322 + $0x1c] sm:$0xf]
        %v345 = vld [vmem:[%s322 + $0x20] sm:$0xf]
        %v346 = vld [vmem:[%s322 + $0x24] sm:$0xf]
        %v347 = vld [vmem:[%s322 + $0x28] sm:$0xf]
        %v348 = vld [vmem:[%s322 + $0x2c] sm:$0xf]
        %v349 = vld [vmem:[%s322 + $0x30] sm:$0xf]
        %v350 = vld [vmem:[%s322 + $0x34] sm:$0xf]
        %v351 = vld [vmem:[%s322 + $0x38] sm:$0xf]
        %v352 = vld [vmem:[%s322 + $0x3c] sm:$0xf]
        %v353 = vld [vmem:[%s322 + $0x40] sm:$0xf]
        %v354 = vld [vmem:[%s322 + $0x44] sm:$0xf]
        %v355 = vld [vmem:[%s322 + $0x48] sm:$0xf]
        %v356 = vld [vmem:[%s322 + $0x4c] sm:$0xf]
        %v357 = vld [vmem:[%s322 + $0x50] sm:$0xf]
        %v358 = vld [vmem:[%s322 + $0x54] sm:$0xf]
        %v359 = vld [vmem:[%s322 + $0x58] sm:$0xf]
        %v360 = vld [vmem:[%s322 + $0x5c] sm:$0xf]
        %v361 = vld [vmem:[%s322 + $0x60] sm:$0xf]
        %v362 = vld [vmem:[%s322 + $0x64] sm:$0xf]
        %v363 = vld [vmem:[%s322 + $0x68] sm:$0xf]
        %v364 = vld [vmem:[%s322 + $0x6c] sm:$0xf]
        %v365 = vld [vmem:[%s322 + $0x70] sm:$0xf]
        %v366 = vld [vmem:[%s322 + $0x74] sm:$0xf]
        %v367 = vld [vmem:[%s322 + $0x78] sm:$0xf]
        %v368 = vld [vmem:[%s322 + $0x7c] sm:$0xf]
        %v369 = vld [vmem:[%s322 + $0x80] sm:$0xf]
        %v370 = vld [vmem:[%s322 + $0x84] sm:$0xf]
        %v371 = vld [vmem:[%s322 + $0x88] sm:$0xf]
        %v372 = vld [vmem:[%s322 + $0x8c] sm:$0xf]
        %v373 = vld [vmem:[%s322 + $0x90] sm:$0xf]
        %v374 = vld [vmem:[%s322 + $0x94] sm:$0xf]
        %v375 = vld [vmem:[%s322 + $0x98] sm:$0xf]
        %v376 = vld [vmem:[%s322 + $0x9c] sm:$0xf]
        %v377 = vld [vmem:[%s322 + $0xa0] sm:$0xf]
        %v378 = vld [vmem:[%s322 + $0xa4] sm:$0xf]
        %v379 = vld [vmem:[%s322 + $0xa8] sm:$0xf]
        %v380 = vld [vmem:[%s322 + $0xac] sm:$0xf]
        %v381 = vld [vmem:[%s322 + $0xb0] sm:$0xf]
        %v382 = vld [vmem:[%s322 + $0xb4] sm:$0xf]
        %v383 = vld [vmem:[%s322 + $0xb8] sm:$0xf]
        %v384 = vld [vmem:[%s322 + $0xbc] sm:$0xf]
        %v385 = vld [vmem:[%s322 + $0xc0] sm:$0xf]
        %v386 = vld [vmem:[%s322 + $0xc4] sm:$0xf]
        %v387 = vld [vmem:[%s322 + $0xc8] sm:$0xf]
        %v388 = vld [vmem:[%s322 + $0xcc] sm:$0xf]
        %v389 = vld [vmem:[%s322 + $0xd0] sm:$0xf]
        %v390 = vld [vmem:[%s322 + $0xd4] sm:$0xf]
        %v391 = vld [vmem:[%s322 + $0xd8] sm:$0xf]
        %v392 = vld [vmem:[%s322 + $0xdc] sm:$0xf]
        %v393 = vld [vmem:[%s322 + $0xe0] sm:$0xf]
        %v394 = vld [vmem:[%s322 + $0xe4] sm:$0xf]
        %v395 = vld [vmem:[%s322 + $0xe8] sm:$0xf]
        %v396 = vld [vmem:[%s322 + $0xec] sm:$0xf]
        %v397 = vld [vmem:[%s322 + $0xf0] sm:$0xf]
        %v398 = vld [vmem:[%s322 + $0xf4] sm:$0xf]
        %v399 = vld [vmem:[%s322 + $0xf8] sm:$0xf]
        %v400 = vld [vmem:[%s322 + $0xfc] sm:$0xf]
        %v401 = vld [vmem:[%s322 + $0x100] sm:$0xf]
        %v402 = vld [vmem:[%s322 + $0x104] sm:$0xf]
        %v403 = vld [vmem:[%s322 + $0x108] sm:$0xf]
        %v404 = vld [vmem:[%s322 + $0x10c] sm:$0xf]
        %v405 = vld [vmem:[%s322 + $0x110] sm:$0xf]
        %v406 = vld [vmem:[%s322 + $0x114] sm:$0xf]
        %v407 = vld [vmem:[%s322 + $0x118] sm:$0xf]
        %v408 = vld [vmem:[%s322 + $0x11c] sm:$0xf]
        %v409 = vld [vmem:[%s322 + $0x120] sm:$0xf]
        %v410 = vld [vmem:[%s322 + $0x124] sm:$0xf]
        %v411 = vld [vmem:[%s322 + $0x128] sm:$0xf]
        %v412 = vld [vmem:[%s322 + $0x12c] sm:$0xf]
        %v413 = vld [vmem:[%s322 + $0x130] sm:$0xf]
        %v414 = vld [vmem:[%s322 + $0x134] sm:$0xf]
        %v415 = vld [vmem:[%s322 + $0x138] sm:$0xf]
        %v416 = vld [vmem:[%s322 + $0x13c] sm:$0xf]
        %v417 = vld [vmem:[%s322 + $0x140] sm:$0xf]
        %v418 = vld [vmem:[%s322 + $0x144] sm:$0xf]
        %v419 = vld [vmem:[%s322 + $0x148] sm:$0xf]
        %v420 = vld [vmem:[%s322 + $0x14c] sm:$0xf]
        %v421 = vld [vmem:[%s322 + $0x150] sm:$0xf]
        %v422 = vld [vmem:[%s322 + $0x154] sm:$0xf]
        %v423 = vld [vmem:[%s322 + $0x158] sm:$0xf]
        %v424 = vld [vmem:[%s322 + $0x15c] sm:$0xf]
        %v425 = vld [vmem:[%s322 + $0x160] sm:$0xf]
        %v426 = vld [vmem:[%s322 + $0x164] sm:$0xf]
        %v427 = vld [vmem:[%s322 + $0x168] sm:$0xf]
        %v428 = vld [vmem:[%s322 + $0x16c] sm:$0xf]
        %v429 = vld [vmem:[%s322 + $0x170] sm:$0xf]
        %v430 = vld [vmem:[%s322 + $0x174] sm:$0xf]
        %v431 = vld [vmem:[%s322 + $0x178] sm:$0xf]
        %v432 = vld [vmem:[%s322 + $0x17c] sm:$0xf]
        %v433 = vld [vmem:[%s322 + $0x180] sm:$0xf]
        %v434 = vld [vmem:[%s322 + $0x184] sm:$0xf]
        %v435 = vld [vmem:[%s322 + $0x188] sm:$0xf]
        %v436 = vld [vmem:[%s322 + $0x18c] sm:$0xf]
        %v437 = vld [vmem:[%s322 + $0x190] sm:$0xf]
        %v438 = vld [vmem:[%s322 + $0x194] sm:$0xf]
        %v439 = vld [vmem:[%s322 + $0x198] sm:$0xf]
        %v440 = vld [vmem:[%s322 + $0x19c] sm:$0xf]
        %v441 = vld [vmem:[%s322 + $0x1a0] sm:$0xf]
        %v442 = vld [vmem:[%s322 + $0x1a4] sm:$0xf]
        %v443 = vld [vmem:[%s322 + $0x1a8] sm:$0xf]
        %v444 = vld [vmem:[%s322 + $0x1ac] sm:$0xf]
        %v445 = vld [vmem:[%s322 + $0x1b0] sm:$0xf]
        %v446 = vld [vmem:[%s322 + $0x1b4] sm:$0xf]
        %v447 = vld [vmem:[%s322 + $0x1b8] sm:$0xf]
        %v448 = vld [vmem:[%s322 + $0x1bc] sm:$0xf]
        %v449 = vld [vmem:[%s322 + $0x1c0] sm:$0xf]
        %v450 = vld [vmem:[%s322 + $0x1c4] sm:$0xf]
        %v451 = vld [vmem:[%s322 + $0x1c8] sm:$0xf]
        %v452 = vld [vmem:[%s322 + $0x1cc] sm:$0xf]
        %v453 = vld [vmem:[%s322 + $0x1d0] sm:$0xf]
        %v454 = vld [vmem:[%s322 + $0x1d4] sm:$0xf]
        %v455 = vld [vmem:[%s322 + $0x1d8] sm:$0xf]
        %v456 = vld [vmem:[%s322 + $0x1dc] sm:$0xf]
        %v457 = vld [vmem:[%s322 + $0x1e0] sm:$0xf]
        %v458 = vld [vmem:[%s322 + $0x1e4] sm:$0xf]
        %v459 = vld [vmem:[%s322 + $0x1e8] sm:$0xf]
        %v460 = vld [vmem:[%s322 + $0x1ec] sm:$0xf]
        %v461 = vld [vmem:[%s322 + $0x1f0] sm:$0xf]
        %v462 = vld [vmem:[%s322 + $0x1f4] sm:$0xf]
        %v463 = vld [vmem:[%s322 + $0x1f8] sm:$0xf]
        %v464 = vld [vmem:[%s322 + $0x1fc] sm:$0xf]
        %v465 = vld [vmem:[%s325] sm:$0x1]
        %v467 = vperm.slane %v465, 0
        %470 = vst [vmem:[#allocation1] ss:$9 sm:$0xff] %v336
        %v471 = vld [vmem:[#allocation1] sm:$0xff]
        %v472 = vld [vmem:[#allocation1 + $0x9] sm:$0xff]
        %v473 = vld [vmem:[#allocation1 + $0x12] sm:$0xff]
        %v474 = vld [vmem:[#allocation1 + $0x1b] sm:$0xff]
        %v475 = vld [vmem:[#allocation1 + $0x24] sm:$0xff]
        %v476 = vld [vmem:[#allocation1 + $0x2d] sm:$0xff]
        %v477 = vld [vmem:[#allocation1 + $0x36] sm:$0xff]
        %v478 = vld [vmem:[#allocation1 + $0x3f] sm:$0xff]
        %v615 = vunpack.c.l.b16 %v337
        %v616 = vunpack.c.l.b16 %v338
        %v617 = vunpack.c.l.b16 %v339
        %v618 = vunpack.c.l.b16 %v340
        %v619 = vunpack.c.l.b16 %v341
        %v620 = vunpack.c.l.b16 %v342
        %v621 = vunpack.c.l.b16 %v343
        %v622 = vunpack.c.l.b16 %v344
        %v623 = vunpack.c.l.b16 %v345
        %v624 = vunpack.c.l.b16 %v346
        %v625 = vunpack.c.l.b16 %v347
        %v626 = vunpack.c.l.b16 %v348
        %v627 = vunpack.c.l.b16 %v349
        %v628 = vunpack.c.l.b16 %v350
        %v629 = vunpack.c.l.b16 %v351
        %v630 = vunpack.c.l.b16 %v352
        %v631 = vunpack.c.l.b16 %v353
        %v632 = vunpack.c.l.b16 %v354
        %v633 = vunpack.c.l.b16 %v355
        %v634 = vunpack.c.l.b16 %v356
        %v635 = vunpack.c.l.b16 %v357
        %v636 = vunpack.c.l.b16 %v358
        %v637 = vunpack.c.l.b16 %v359
        %v638 = vunpack.c.l.b16 %v360
        %v639 = vunpack.c.l.b16 %v361
        %v640 = vunpack.c.l.b16 %v362
        %v641 = vunpack.c.l.b16 %v363
        %v642 = vunpack.c.l.b16 %v364
        %v643 = vunpack.c.l.b16 %v365
        %v644 = vunpack.c.l.b16 %v366
        %v645 = vunpack.c.l.b16 %v367
        %v646 = vunpack.c.l.b16 %v368
        %v647 = vunpack.c.l.b16 %v369
        %v648 = vunpack.c.l.b16 %v370
        %v649 = vunpack.c.l.b16 %v371
        %v650 = vunpack.c.l.b16 %v372
        %v651 = vunpack.c.l.b16 %v373
        %v652 = vunpack.c.l.b16 %v374
        %v653 = vunpack.c.l.b16 %v375
        %v654 = vunpack.c.l.b16 %v376
        %v655 = vunpack.c.l.b16 %v377
        %v656 = vunpack.c.l.b16 %v378
        %v657 = vunpack.c.l.b16 %v379
        %v658 = vunpack.c.l.b16 %v380
        %v659 = vunpack.c.l.b16 %v381
        %v660 = vunpack.c.l.b16 %v382
        %v661 = vunpack.c.l.b16 %v383
        %v662 = vunpack.c.l.b16 %v384
        %v663 = vunpack.c.l.b16 %v385
        %v664 = vunpack.c.l.b16 %v386
        %v665 = vunpack.c.l.b16 %v387
        %v666 = vunpack.c.l.b16 %v388
        %v667 = vunpack.c.l.b16 %v389
        %v668 = vunpack.c.l.b16 %v390
        %v669 = vunpack.c.l.b16 %v391
        %v670 = vunpack.c.l.b16 %v392
        %v671 = vunpack.c.l.b16 %v393
        %v672 = vunpack.c.l.b16 %v394
        %v673 = vunpack.c.l.b16 %v395
        %v674 = vunpack.c.l.b16 %v396
        %v675 = vunpack.c.l.b16 %v397
        %v676 = vunpack.c.l.b16 %v398
        %v677 = vunpack.c.l.b16 %v399
        %v678 = vunpack.c.l.b16 %v400
        %v679 = vunpack.c.l.b16 %v401
        %v680 = vunpack.c.l.b16 %v402
        %v681 = vunpack.c.l.b16 %v403
        %v682 = vunpack.c.l.b16 %v404
        %v683 = vunpack.c.l.b16 %v405
        %v684 = vunpack.c.l.b16 %v406
        %v685 = vunpack.c.l.b16 %v407
        %v686 = vunpack.c.l.b16 %v408
        %v687 = vunpack.c.l.b16 %v409
        %v688 = vunpack.c.l.b16 %v410
        %v689 = vunpack.c.l.b16 %v411
        %v690 = vunpack.c.l.b16 %v412
        %v691 = vunpack.c.l.b16 %v413
        %v692 = vunpack.c.l.b16 %v414
        %v693 = vunpack.c.l.b16 %v415
        %v694 = vunpack.c.l.b16 %v416
        %v695 = vunpack.c.l.b16 %v417
        %v696 = vunpack.c.l.b16 %v418
        %v697 = vunpack.c.l.b16 %v419
        %v698 = vunpack.c.l.b16 %v420
        %v699 = vunpack.c.l.b16 %v421
        %v700 = vunpack.c.l.b16 %v422
        %v701 = vunpack.c.l.b16 %v423
        %v702 = vunpack.c.l.b16 %v424
        %v703 = vunpack.c.l.b16 %v425
        %v704 = vunpack.c.l.b16 %v426
        %v705 = vunpack.c.l.b16 %v427
        %v706 = vunpack.c.l.b16 %v428
        %v707 = vunpack.c.l.b16 %v429
        %v708 = vunpack.c.l.b16 %v430
        %v709 = vunpack.c.l.b16 %v431
        %v710 = vunpack.c.l.b16 %v432
        %v711 = vunpack.c.l.b16 %v433
        %v712 = vunpack.c.l.b16 %v434
        %v713 = vunpack.c.l.b16 %v435
        %v714 = vunpack.c.l.b16 %v436
        %v715 = vunpack.c.l.b16 %v437
        %v716 = vunpack.c.l.b16 %v438
        %v717 = vunpack.c.l.b16 %v439
        %v718 = vunpack.c.l.b16 %v440
        %v719 = vunpack.c.l.b16 %v441
        %v720 = vunpack.c.l.b16 %v442
        %v721 = vunpack.c.l.b16 %v443
        %v722 = vunpack.c.l.b16 %v444
        %v723 = vunpack.c.l.b16 %v445
        %v724 = vunpack.c.l.b16 %v446
        %v725 = vunpack.c.l.b16 %v447
        %v726 = vunpack.c.l.b16 %v448
        %v727 = vunpack.c.l.b16 %v449
        %v728 = vunpack.c.l.b16 %v450
        %v729 = vunpack.c.l.b16 %v451
        %v730 = vunpack.c.l.b16 %v452
        %v731 = vunpack.c.l.b16 %v453
        %v732 = vunpack.c.l.b16 %v454
        %v733 = vunpack.c.l.b16 %v455
        %v734 = vunpack.c.l.b16 %v456
        %v735 = vunpack.c.l.b16 %v457
        %v736 = vunpack.c.l.b16 %v458
        %v737 = vunpack.c.l.b16 %v459
        %v738 = vunpack.c.l.b16 %v460
        %v739 = vunpack.c.l.b16 %v461
        %v740 = vunpack.c.l.b16 %v462
        %v741 = vunpack.c.l.b16 %v463
        %v742 = vunpack.c.l.b16 %v464
        %v743 = vpack.c.b16 %v616, %v615
        %v744 = vpack.c.b16 %v618, %v617
        %v745 = vpack.c.b16 %v620, %v619
        %v746 = vpack.c.b16 %v622, %v621
        %v747 = vpack.c.b16 %v624, %v623
        %v748 = vpack.c.b16 %v626, %v625
        %v749 = vpack.c.b16 %v628, %v627
        %v750 = vpack.c.b16 %v630, %v629
        %v751 = vpack.c.b16 %v632, %v631
        %v752 = vpack.c.b16 %v634, %v633
        %v753 = vpack.c.b16 %v636, %v635
        %v754 = vpack.c.b16 %v638, %v637
        %v755 = vpack.c.b16 %v640, %v639
        %v756 = vpack.c.b16 %v642, %v641
        %v757 = vpack.c.b16 %v644, %v643
        %v758 = vpack.c.b16 %v646, %v645
        %v759 = vpack.c.b16 %v648, %v647
        %v760 = vpack.c.b16 %v650, %v649
        %v761 = vpack.c.b16 %v652, %v651
        %v762 = vpack.c.b16 %v654, %v653
        %v763 = vpack.c.b16 %v656, %v655
        %v764 = vpack.c.b16 %v658, %v657
        %v765 = vpack.c.b16 %v660, %v659
        %v766 = vpack.c.b16 %v662, %v661
        %v767 = vpack.c.b16 %v664, %v663
        %v768 = vpack.c.b16 %v666, %v665
        %v769 = vpack.c.b16 %v668, %v667
        %v770 = vpack.c.b16 %v670, %v669
        %v771 = vpack.c.b16 %v672, %v671
        %v772 = vpack.c.b16 %v674, %v673
        %v773 = vpack.c.b16 %v676, %v675
        %v774 = vpack.c.b16 %v678, %v677
        %v775 = vpack.c.b16 %v680, %v679
        %v776 = vpack.c.b16 %v682, %v681
        %v777 = vpack.c.b16 %v684, %v683
        %v778 = vpack.c.b16 %v686, %v685
        %v779 = vpack.c.b16 %v688, %v687
        %v780 = vpack.c.b16 %v690, %v689
        %v781 = vpack.c.b16 %v692, %v691
        %v782 = vpack.c.b16 %v694, %v693
        %v783 = vpack.c.b16 %v696, %v695
        %v784 = vpack.c.b16 %v698, %v697
        %v785 = vpack.c.b16 %v700, %v699
        %v786 = vpack.c.b16 %v702, %v701
        %v787 = vpack.c.b16 %v704, %v703
        %v788 = vpack.c.b16 %v706, %v705
        %v789 = vpack.c.b16 %v708, %v707
        %v790 = vpack.c.b16 %v710, %v709
        %v791 = vpack.c.b16 %v712, %v711
        %v792 = vpack.c.b16 %v714, %v713
        %v793 = vpack.c.b16 %v716, %v715
        %v794 = vpack.c.b16 %v718, %v717
        %v795 = vpack.c.b16 %v720, %v719
        %v796 = vpack.c.b16 %v722, %v721
        %v797 = vpack.c.b16 %v724, %v723
        %v798 = vpack.c.b16 %v726, %v725
        %v799 = vpack.c.b16 %v728, %v727
        %v800 = vpack.c.b16 %v730, %v729
        %v801 = vpack.c.b16 %v732, %v731
        %v802 = vpack.c.b16 %v734, %v733
        %v803 = vpack.c.b16 %v736, %v735
        %v804 = vpack.c.b16 %v738, %v737
        %v805 = vpack.c.b16 %v740, %v739
        %v806 = vpack.c.b16 %v742, %v741
        %871 = vmatpush.bf16.msra.mxu0 %v750
        %872 = vmatpush.bf16.msra.mxu0 %v749
        %873 = vmatpush.bf16.msra.mxu0 %v748
        %874 = vmatpush.bf16.msra.mxu0 %v747
        %875 = vmatpush.bf16.msra.mxu0 %v746
        %876 = vmatpush.bf16.msra.mxu0 %v745
        %877 = vmatpush.bf16.msra.mxu0 %v744
        %878 = vmatpush.bf16.msra.mxu0 %v743
        %879 = vmatmul.bf16.gmra.mxu0 %v471
        %v880 = vpop.f32.mrf.mxu0
        %v881 = vadd.f32 %v467, %v880
        %v882 = vpop.f32.mrf.mxu0
        %883 = vdwg.mxu0
        %884 = vmatpush.bf16.msra.mxu0 %v758
        %885 = vmatpush.bf16.msra.mxu0 %v757
        %886 = vmatpush.bf16.msra.mxu0 %v756
        %887 = vmatpush.bf16.msra.mxu0 %v755
        %888 = vmatpush.bf16.msra.mxu0 %v754
        %889 = vmatpush.bf16.msra.mxu0 %v753
        %890 = vmatpush.bf16.msra.mxu0 %v752
        %891 = vmatpush.bf16.msra.mxu0 %v751
        %892 = vmatmul.bf16.gmra.mxu0 %v472
        %v893 = vpop.f32.mrf.mxu0
        %v894 = vadd.f32 %v881, %v893
        %v895 = vpop.f32.mrf.mxu0
        %896 = vdwg.mxu0
        %897 = vmatpush.bf16.msra.mxu0 %v766
        %898 = vmatpush.bf16.msra.mxu0 %v765
        %899 = vmatpush.bf16.msra.mxu0 %v764
        %900 = vmatpush.bf16.msra.mxu0 %v763
        %901 = vmatpush.bf16.msra.mxu0 %v762
        %902 = vmatpush.bf16.msra.mxu0 %v761
        %903 = vmatpush.bf16.msra.mxu0 %v760
        %904 = vmatpush.bf16.msra.mxu0 %v759
        %905 = vmatmul.bf16.gmra.mxu0 %v473
        %v906 = vpop.f32.mrf.mxu0
        %v907 = vadd.f32 %v894, %v906
        %v908 = vpop.f32.mrf.mxu0
        %909 = vdwg.mxu0
        %910 = vmatpush.bf16.msra.mxu0 %v774
        %911 = vmatpush.bf16.msra.mxu0 %v773
        %912 = vmatpush.bf16.msra.mxu0 %v772
        %913 = vmatpush.bf16.msra.mxu0 %v771
        %914 = vmatpush.bf16.msra.mxu0 %v770
        %915 = vmatpush.bf16.msra.mxu0 %v769
        %916 = vmatpush.bf16.msra.mxu0 %v768
        %917 = vmatpush.bf16.msra.mxu0 %v767
        %918 = vmatmul.bf16.gmra.mxu0 %v474
        %v919 = vpop.f32.mrf.mxu0
        %v920 = vadd.f32 %v907, %v919
        %v921 = vpop.f32.mrf.mxu0
        %922 = vdwg.mxu0
        %923 = vmatpush.bf16.msra.mxu0 %v782
        %924 = vmatpush.bf16.msra.mxu0 %v781
        %925 = vmatpush.bf16.msra.mxu0 %v780
        %926 = vmatpush.bf16.msra.mxu0 %v779
        %927 = vmatpush.bf16.msra.mxu0 %v778
        %928 = vmatpush.bf16.msra.mxu0 %v777
        %929 = vmatpush.bf16.msra.mxu0 %v776
        %930 = vmatpush.bf16.msra.mxu0 %v775
        %931 = vmatmul.bf16.gmra.mxu0 %v475
        %v932 = vpop.f32.mrf.mxu0
        %v933 = vadd.f32 %v920, %v932
        %v934 = vpop.f32.mrf.mxu0
        %935 = vdwg.mxu0
        %936 = vmatpush.bf16.msra.mxu0 %v790
        %937 = vmatpush.bf16.msra.mxu0 %v789
        %938 = vmatpush.bf16.msra.mxu0 %v788
        %939 = vmatpush.bf16.msra.mxu0 %v787
        %940 = vmatpush.bf16.msra.mxu0 %v786
        %941 = vmatpush.bf16.msra.mxu0 %v785
        %942 = vmatpush.bf16.msra.mxu0 %v784
        %943 = vmatpush.bf16.msra.mxu0 %v783
        %944 = vmatmul.bf16.gmra.mxu0 %v476
        %v945 = vpop.f32.mrf.mxu0
        %v946 = vadd.f32 %v933, %v945
        %v947 = vpop.f32.mrf.mxu0
        %948 = vdwg.mxu0
        %949 = vmatpush.bf16.msra.mxu0 %v798
        %950 = vmatpush.bf16.msra.mxu0 %v797
        %951 = vmatpush.bf16.msra.mxu0 %v796
        %952 = vmatpush.bf16.msra.mxu0 %v795
        %953 = vmatpush.bf16.msra.mxu0 %v794
        %954 = vmatpush.bf16.msra.mxu0 %v793
        %955 = vmatpush.bf16.msra.mxu0 %v792
        %956 = vmatpush.bf16.msra.mxu0 %v791
        %957 = vmatmul.bf16.gmra.mxu0 %v477
        %v958 = vpop.f32.mrf.mxu0
        %v959 = vadd.f32 %v946, %v958
        %v960 = vpop.f32.mrf.mxu0
        %961 = vdwg.mxu0
        %962 = vmatpush.bf16.msra.mxu0 %v806
        %963 = vmatpush.bf16.msra.mxu0 %v805
        %964 = vmatpush.bf16.msra.mxu0 %v804
        %965 = vmatpush.bf16.msra.mxu0 %v803
        %966 = vmatpush.bf16.msra.mxu0 %v802
        %967 = vmatpush.bf16.msra.mxu0 %v801
        %968 = vmatpush.bf16.msra.mxu0 %v800
        %969 = vmatpush.bf16.msra.mxu0 %v799
        %970 = vmatmul.bf16.gmra.mxu0 %v478
        %v971 = vpop.f32.mrf.mxu0
        %v972 = vadd.f32 %v959, %v971
        %v973 = vpop.f32.mrf.mxu0
        %974 = vdwg.mxu0
        %v975 = vmul.f32 %v972, 0.5
        %v976 = vmul.f32 %v975, 1.442695
        %v977 = vpow.pop %v976
        %v978 = vld [vmem:[%s317] sm:$0x3]
        %980 = vrot.lane.b32.xlu0 %v978, 32
        %v981 = vpop.permute.xlu0 %980
        %v983 = vmul.f32 %v977, %v981
        %985 = vrot.lane.b32.xlu0 %v983, 96
        %v986 = vpop.permute.xlu0 %985
        %v988 = vadd.f32 %v972, %v986
        %v989 = vpack.c.bf16 %v988, %v988
        %v990 = vld [vmem:[%s330] sm:$0xff]
        %v991 = vld [vmem:[%s330 + $0x8] sm:$0xff]
        %v992 = vld [vmem:[%s330 + $0x10] sm:$0xff]
        %v993 = vld [vmem:[%s330 + $0x18] sm:$0xff]
        %v994 = vld [vmem:[%s330 + $0x20] sm:$0xff]
        %v995 = vld [vmem:[%s330 + $0x28] sm:$0xff]
        %v996 = vld [vmem:[%s330 + $0x30] sm:$0xff]
        %v997 = vld [vmem:[%s330 + $0x38] sm:$0xff]
        %v998 = vld [vmem:[%s330 + $0x40] sm:$0xff]
        %v999 = vld [vmem:[%s330 + $0x48] sm:$0xff]
        %v1000 = vld [vmem:[%s330 + $0x50] sm:$0xff]
        %v1001 = vld [vmem:[%s330 + $0x58] sm:$0xff]
        %v1002 = vld [vmem:[%s330 + $0x60] sm:$0xff]
        %v1003 = vld [vmem:[%s330 + $0x68] sm:$0xff]
        %v1004 = vld [vmem:[%s330 + $0x70] sm:$0xff]
        %v1005 = vld [vmem:[%s330 + $0x78] sm:$0xff]
        %v1006 = vld [vmem:[%s334] sm:$0xff]
        %v1008 = vperm.slane %v1006, 0
        %v1009 = vperm.slane %v1006, 1
        %v1010 = vperm.slane %v1006, 2
        %v1011 = vperm.slane %v1006, 3
        %v1012 = vperm.slane %v1006, 4
        %v1013 = vperm.slane %v1006, 5
        %v1014 = vperm.slane %v1006, 6
        %v1015 = vperm.slane %v1006, 7
        %v1040 = vunpack.c.l.b16 %v990
        %v1041 = vunpack.c.h.b16 %v990
        %v1042 = vunpack.c.l.b16 %v991
        %v1043 = vunpack.c.h.b16 %v991
        %v1044 = vunpack.c.l.b16 %v992
        %v1045 = vunpack.c.h.b16 %v992
        %v1046 = vunpack.c.l.b16 %v993
        %v1047 = vunpack.c.h.b16 %v993
        %v1048 = vunpack.c.l.b16 %v994
        %v1049 = vunpack.c.h.b16 %v994
        %v1050 = vunpack.c.l.b16 %v995
        %v1051 = vunpack.c.h.b16 %v995
        %v1052 = vunpack.c.l.b16 %v996
        %v1053 = vunpack.c.h.b16 %v996
        %v1054 = vunpack.c.l.b16 %v997
        %v1055 = vunpack.c.h.b16 %v997
        %v1056 = vunpack.c.l.b16 %v998
        %v1057 = vunpack.c.h.b16 %v998
        %v1058 = vunpack.c.l.b16 %v999
        %v1059 = vunpack.c.h.b16 %v999
        %v1060 = vunpack.c.l.b16 %v1000
        %v1061 = vunpack.c.h.b16 %v1000
        %v1062 = vunpack.c.l.b16 %v1001
        %v1063 = vunpack.c.h.b16 %v1001
        %v1064 = vunpack.c.l.b16 %v1002
        %v1065 = vunpack.c.h.b16 %v1002
        %v1066 = vunpack.c.l.b16 %v1003
        %v1067 = vunpack.c.h.b16 %v1003
        %v1068 = vunpack.c.l.b16 %v1004
        %v1069 = vunpack.c.h.b16 %v1004
        %v1070 = vunpack.c.l.b16 %v1005
        %v1071 = vunpack.c.h.b16 %v1005
        %v1072 = vpack.c.b16 %v1048, %v1040
        %v1073 = vpack.c.b16 %v1049, %v1041
        %v1074 = vpack.c.b16 %v1050, %v1042
        %v1075 = vpack.c.b16 %v1051, %v1043
        %v1076 = vpack.c.b16 %v1052, %v1044
        %v1077 = vpack.c.b16 %v1053, %v1045
        %v1078 = vpack.c.b16 %v1054, %v1046
        %v1079 = vpack.c.b16 %v1055, %v1047
        %v1080 = vpack.c.b16 %v1064, %v1056
        %v1081 = vpack.c.b16 %v1065, %v1057
        %v1082 = vpack.c.b16 %v1066, %v1058
        %v1083 = vpack.c.b16 %v1067, %v1059
        %v1084 = vpack.c.b16 %v1068, %v1060
        %v1085 = vpack.c.b16 %v1069, %v1061
        %v1086 = vpack.c.b16 %v1070, %v1062
        %v1087 = vpack.c.b16 %v1071, %v1063
        %vm1104 = vcmask 261120
        %v1106 = vsel %vm1104, %v989, 0
        %1108 = vmatpush.bf16.msra.mxu0 0
        %1109 = vmatpush.bf16.msra.mxu0 0
        %1110 = vmatpush.bf16.msra.mxu0 0
        %1111 = vmatpush.bf16.msra.mxu0 0
        %1112 = vmatpush.bf16.msra.mxu0 0
        %1113 = vmatpush.bf16.msra.mxu0 0
        %1114 = vmatpush.bf16.msra.mxu0 %v1080
        %1115 = vmatpush.bf16.msra.mxu0 %v1072
        %1116 = vmatmul.bf16.gmra.mxu0 %v1106
        %v1117 = vpop.f32.mrf.mxu0
        %v1118 = vadd.f32 %v1008, %v1117
        %v1119 = vpop.f32.mrf.mxu0
        %1120 = vdwg.mxu0
        %1121 = vmatpush.bf16.msra.mxu0 0
        %1122 = vmatpush.bf16.msra.mxu0 0
        %1123 = vmatpush.bf16.msra.mxu0 0
        %1124 = vmatpush.bf16.msra.mxu0 0
        %1125 = vmatpush.bf16.msra.mxu0 0
        %1126 = vmatpush.bf16.msra.mxu0 0
        %1127 = vmatpush.bf16.msra.mxu0 %v1081
        %1128 = vmatpush.bf16.msra.mxu0 %v1073
        %1129 = vmatmul.bf16.gmra.mxu0 %v1106
        %v1130 = vpop.f32.mrf.mxu0
        %v1131 = vadd.f32 %v1009, %v1130
        %v1132 = vpop.f32.mrf.mxu0
        %1133 = vdwg.mxu0
        %1134 = vmatpush.bf16.msra.mxu0 0
        %1135 = vmatpush.bf16.msra.mxu0 0
        %1136 = vmatpush.bf16.msra.mxu0 0
        %1137 = vmatpush.bf16.msra.mxu0 0
        %1138 = vmatpush.bf16.msra.mxu0 0
        %1139 = vmatpush.bf16.msra.mxu0 0
        %1140 = vmatpush.bf16.msra.mxu0 %v1082
        %1141 = vmatpush.bf16.msra.mxu0 %v1074
        %1142 = vmatmul.bf16.gmra.mxu0 %v1106
        %v1143 = vpop.f32.mrf.mxu0
        %v1144 = vadd.f32 %v1010, %v1143
        %v1145 = vpop.f32.mrf.mxu0
        %1146 = vdwg.mxu0
        %1147 = vmatpush.bf16.msra.mxu0 0
        %1148 = vmatpush.bf16.msra.mxu0 0
        %1149 = vmatpush.bf16.msra.mxu0 0
        %1150 = vmatpush.bf16.msra.mxu0 0
        %1151 = vmatpush.bf16.msra.mxu0 0
        %1152 = vmatpush.bf16.msra.mxu0 0
        %1153 = vmatpush.bf16.msra.mxu0 %v1083
        %1154 = vmatpush.bf16.msra.mxu0 %v1075
        %1155 = vmatmul.bf16.gmra.mxu0 %v1106
        %v1156 = vpop.f32.mrf.mxu0
        %v1157 = vadd.f32 %v1011, %v1156
        %v1158 = vpop.f32.mrf.mxu0
        %1159 = vdwg.mxu0
        %1160 = vmatpush.bf16.msra.mxu0 0
        %1161 = vmatpush.bf16.msra.mxu0 0
        %1162 = vmatpush.bf16.msra.mxu0 0
        %1163 = vmatpush.bf16.msra.mxu0 0
        %1164 = vmatpush.bf16.msra.mxu0 0
        %1165 = vmatpush.bf16.msra.mxu0 0
        %1166 = vmatpush.bf16.msra.mxu0 %v1084
        %1167 = vmatpush.bf16.msra.mxu0 %v1076
        %1168 = vmatmul.bf16.gmra.mxu0 %v1106
        %v1169 = vpop.f32.mrf.mxu0
        %v1170 = vadd.f32 %v1012, %v1169
        %v1171 = vpop.f32.mrf.mxu0
        %1172 = vdwg.mxu0
        %1173 = vmatpush.bf16.msra.mxu0 0
        %1174 = vmatpush.bf16.msra.mxu0 0
        %1175 = vmatpush.bf16.msra.mxu0 0
        %1176 = vmatpush.bf16.msra.mxu0 0
        %1177 = vmatpush.bf16.msra.mxu0 0
        %1178 = vmatpush.bf16.msra.mxu0 0
        %1179 = vmatpush.bf16.msra.mxu0 %v1085
        %1180 = vmatpush.bf16.msra.mxu0 %v1077
        %1181 = vmatmul.bf16.gmra.mxu0 %v1106
        %v1182 = vpop.f32.mrf.mxu0
        %v1183 = vadd.f32 %v1013, %v1182
        %v1184 = vpop.f32.mrf.mxu0
        %1185 = vdwg.mxu0
        %1186 = vmatpush.bf16.msra.mxu0 0
        %1187 = vmatpush.bf16.msra.mxu0 0
        %1188 = vmatpush.bf16.msra.mxu0 0
        %1189 = vmatpush.bf16.msra.mxu0 0
        %1190 = vmatpush.bf16.msra.mxu0 0
        %1191 = vmatpush.bf16.msra.mxu0 0
        %1192 = vmatpush.bf16.msra.mxu0 %v1086
        %1193 = vmatpush.bf16.msra.mxu0 %v1078
        %1194 = vmatmul.bf16.gmra.mxu0 %v1106
        %v1195 = vpop.f32.mrf.mxu0
        %v1196 = vadd.f32 %v1014, %v1195
        %v1197 = vpop.f32.mrf.mxu0
        %1198 = vdwg.mxu0
        %1199 = vmatpush.bf16.msra.mxu0 0
        %1200 = vmatpush.bf16.msra.mxu0 0
        %1201 = vmatpush.bf16.msra.mxu0 0
        %1202 = vmatpush.bf16.msra.mxu0 0
        %1203 = vmatpush.bf16.msra.mxu0 0
        %1204 = vmatpush.bf16.msra.mxu0 0
        %1205 = vmatpush.bf16.msra.mxu0 %v1087
        %1206 = vmatpush.bf16.msra.mxu0 %v1079
        %1207 = vmatmul.bf16.gmra.mxu0 %v1106
        %v1208 = vpop.f32.mrf.mxu0
        %v1209 = vadd.f32 %v1015, %v1208
        %v1210 = vpop.f32.mrf.mxu0
        %1211 = vdwg.mxu0
        %v1220 = vrot.slane %v1131, 6
        %v1221 = vrot.slane %v1144, 4
        %v1222 = vrot.slane %v1157, 2
        %v1223 = vrot.slane %v1183, 6
        %v1224 = vrot.slane %v1196, 4
        %v1225 = vrot.slane %v1209, 2
        %vm1226 = vcmask 1041408
        %v1227 = vsel %vm1226, %v1118, %v1220
        %vm1228 = vcmask 1045508
        %v1229 = vsel %vm1228, %v1221, %v1222
        %vm1230 = vcmask 1043456
        %v1231 = vsel %vm1230, %v1227, %v1229
        %v1232 = vsel %vm1226, %v1170, %v1223
        %v1233 = vsel %vm1228, %v1224, %v1225
        %v1234 = vsel %vm1230, %v1232, %v1233
        %1237 = vst [vmem:[%s309] sm:$0xff] %v1231
        %1238 = vst [vmem:[%s309 + $0x8] sm:$0xff] %v1234
        %s1239 = sand.u32 %s184, 1
        %s1240 = scalar_lea.sflag [#allocation3], %s1239
        %s1241 = sand.u32 %s184, 1
        %s1242 = smul.addr %s1241, 16
        %s1243 = scalar_lea.vmem [#allocation2], %s1242
        // Predicated region
        $region45: #{tpu_custom_call.1} parent=43 // pred_check
          %p1244 = pneg %p194
        $region46: #{tpu_custom_call.1} parent=43 // pred_check_branch
          %1246 = sbr.rel (%p1244) target = $region48
        $region47: #{tpu_custom_call.1} parent=43 // pred_region
          %1248 = vsyncadd %s1240, 0
          %s1249 = smul.addr %s20, 8
          %s1250 = smul.addr %s1249, 2
          %s1251 = scalar_lea.hbm %s6, %s1250
          %s1253 = sshll.u32 %s1243, 4
          %s1254 = int_to_ptr.vmem [resolvable:$true] %s1253
          %s1255 = sshll.u32 %s1251, 4
          %s1256 = int_to_ptr.hbm [resolvable:$true] %s1255
          %1258 = dma.vmem_to_hbm [thread:$0]  %s1254, 256, %s1256, %s1240
        $region48: #{tpu_custom_call.1} parent=43 // pred_fallthru
          _
      $region44: #{tpu_custom_call.1} parent=5 // pred_fallthru
        _
      %p1259 = scmp.le.s32.totalorder 2, %s15
      // Predicated region
      $region49: #{tpu_custom_call.1} parent=5 // pred_check
        %p1260 = pneg %p1259
      $region50: #{tpu_custom_call.1} parent=5 // pred_check_branch
        %1262 = sbr.rel (%p1260) target = $region52
      $region51: #{tpu_custom_call.1} parent=5 // pred_region
        %s1263 = ssub.s32 %s15, 2
        // Predicated region
        $region53: #{tpu_custom_call.1} parent=51 // pred_check
          %p1264 = pneg %p200
        $region54: #{tpu_custom_call.1} parent=51 // pred_check_branch
          %1266 = sbr.rel (%p1264) target = $region56
        $region55: #{tpu_custom_call.1} parent=51 // pred_region
          %s1267 = sand.u32 %s185, 1
          %s1268 = scalar_lea.sflag [#allocation3], %s1267
          %s1269 = sand.u32 %s185, 1
          %s1270 = smul.addr %s1269, 16
          %s1271 = scalar_lea.vmem [#allocation2], %s1270
          %1273 = dma.done %s1268, 256
        $region56: #{tpu_custom_call.1} parent=51 // pred_fallthru
          _
      $region52: #{tpu_custom_call.1} parent=5 // pred_fallthru
        _
    $region6: #{tpu_custom_call.1} parent=1 // loop_footer
      %s19 = sadd.s32 1, %s15
    $region7: #{tpu_custom_call.1} parent=1 // loop_footer_branch
      %14 = sbr.rel target = $region3
    $region8: #{tpu_custom_call.1} parent=1 // loop_exit
      _
    %1274 = vsyncpa [#allocation3], 1
    %s1275 = scalar_lea.sflag [#allocation3], 1
    %1276 = vsyncpa %s1275, 1

</llo_original>
